<compile_context>
chip_gen: v7x
topology: tpu7x:2x2x1
jax: 0.10.0
libtpu: 0.0.40
codegen_flags: <defaults>
</compile_context>

<pallas_src>
import functools

import jax
import jax.numpy as jnp
from jax import lax
from jax.experimental import pallas as pl
from jax.experimental.pallas import tpu as pltpu


_SUBLANE = 8
_LANE = 128
_MAX_BLOCK_COLS = 32768                # lane-dim cap for the fallback path
_TARGET_BLOCK_ELEMS = 1024 * 1024      # ~4 MiB of f32 per input tile
_VMEM_LIMIT_BYTES = 48 * 1024 * 1024   # explicit: v5e default scoped is 16 MiB


def _mae_kernel(pred_ref, tgt_ref, sum_ref, cnt_ref, acc_sum, acc_cnt,
                *, rows, cols, mask_rows, mask_cols, grouped):
    i = pl.program_id(0)   # row-block axis ("parallel")
    j = pl.program_id(1)   # col-block axis ("arbitrary" reduction)

    @pl.when(j == 0)
    def _init():
        acc_sum[...] = jnp.zeros_like(acc_sum)
        acc_cnt[...] = jnp.zeros_like(acc_cnt)

    p = pred_ref[...].astype(jnp.float32)
    t = tgt_ref[...].astype(jnp.float32)
    blk_r, blk_c = p.shape

    def accumulate(apply_tail_masks):
        valid = jnp.logical_not(jnp.isnan(t))
        # Tail masks are correct for every block (all-true on interior ones);
        # they are only *traced/executed* on boundary blocks via pl.when.
        if apply_tail_masks and mask_rows:
            row_iota = lax.broadcasted_iota(jnp.int32, (blk_r, blk_c), 0)
            valid = jnp.logical_and(valid, row_iota < (rows - i * blk_r))
        if apply_tail_masks and mask_cols:
            col_iota = lax.broadcasted_iota(jnp.int32, (blk_r, blk_c), 1)
            valid = jnp.logical_and(valid, col_iota < (cols - j * blk_c))
        err = jnp.where(valid, jnp.abs(p - t), 0.0)
        cnt = valid.astype(jnp.int32)
        if grouped:
            # Fold the tile down to (8, blk_c) with pure VPU adds before the
            # scratch read-modify-write (cuts vld/vst traffic ~blk_r/8x).
            err = err.reshape(blk_r // _SUBLANE, _SUBLANE, blk_c).sum(axis=0)
            cnt = cnt.reshape(blk_r // _SUBLANE, _SUBLANE, blk_c).sum(axis=0)
        acc_sum[...] += err
        acc_cnt[...] += cnt

    if mask_rows or mask_cols:
        boundary = None
        if mask_rows:
            boundary = i == pl.num_programs(0) - 1
        if mask_cols:
            c_last = j == pl.num_programs(1) - 1
            boundary = c_last if boundary is None else jnp.logical_or(boundary,
                                                                      c_last)

        @pl.when(boundary)
        def _tail():
            accumulate(True)

        @pl.when(jnp.logical_not(boundary))
        def _interior():
            accumulate(False)
    else:
        accumulate(False)

    @pl.when(j == pl.num_programs(1) - 1)
    def _finalize():
        s = jnp.sum(acc_sum[...])
        # Promote per-element counts (small ints) to f32 before the reduce so
        # the per-row-block partial can never overflow int32.
        c = jnp.sum(acc_cnt[...].astype(jnp.float32))
        sum_ref[...] = jnp.full((1, _SUBLANE, _LANE), s, dtype=jnp.float32)
        cnt_ref[...] = jnp.full((1, _SUBLANE, _LANE), c, dtype=jnp.float32)


def _flatten_like_torch(x):
    """Match torch.flatten(start_dim=1) semantics (plus 0-D/1-D handling)."""
    if x.ndim > 2:
        return x.reshape(x.shape[0], -1)
    if x.ndim == 1:
        return x.reshape(1, -1)
    if x.ndim == 0:
        return x.reshape(1, 1)
    return x


def custom_mae_loss(prediction, target):
    """NaN-ignoring mean absolute error, matching CustomMAELoss.forward."""
    prediction = _flatten_like_torch(prediction)
    target = _flatten_like_torch(target)
    assert prediction.shape == target.shape, (
        "Prediction and target must have the same shape")

    B, N = prediction.shape
    total = B * N
    itemsize = max(prediction.dtype.itemsize, target.dtype.itemsize)
    # Sublane packing: 8 rows for f32, 16 for bf16, 32 for int8/fp8.
    row_align = max(_SUBLANE, 32 // max(itemsize, 1))

    # Re-view the (row-major contiguous) data as a lane-aligned slab for free
    # (no HBM copy).  Skip candidates that would leave < 8 rows (would waste
    # 7/8 of every vreg); fall back to (B, N) + in-kernel masking otherwise.
    R, C = B, N
    for cand in (8192, 4096, 2048, 1024, 512, 256, 128):
        if total % cand == 0 and total // cand >= _SUBLANE:
            R, C = total // cand, cand
            break
    pred2d = prediction.reshape(R, C)
    tgt2d = target.reshape(R, C)

    # Prefer full-width blocks (single contiguous HBM run per DMA); shrink
    # block_r to hit the per-input tile budget.
    block_c = C if C <= _MAX_BLOCK_COLS else _MAX_BLOCK_COLS
    r_cap = max(row_align,
                (_TARGET_BLOCK_ELEMS // block_c) // row_align * row_align)
    block_r = R if R <= r_cap else r_cap

    grid_r = pl.cdiv(R, block_r)
    grid_c = pl.cdiv(C, block_c)
    mask_rows = (R % block_r) != 0
    mask_cols = (C % block_c) != 0
    grouped = (block_r % _SUBLANE) == 0
    acc_rows = _SUBLANE if grouped else block_r

    kernel = functools.partial(_mae_kernel, rows=R, cols=C,
                               mask_rows=mask_rows, mask_cols=mask_cols,
                               grouped=grouped)

    out_bytes = 2 * grid_r * _SUBLANE * _LANE * 4
    cost = pl.CostEstimate(
        flops=5 * total,
        transcendentals=0,
        bytes_accessed=total * (prediction.dtype.itemsize
                                + target.dtype.itemsize) + out_bytes,
    )

    sums, counts = pl.pallas_call(
        kernel,
        out_shape=(
            jax.ShapeDtypeStruct((grid_r, _SUBLANE, _LANE), jnp.float32),
            jax.ShapeDtypeStruct((grid_r, _SUBLANE, _LANE), jnp.float32),
        ),
        grid_spec=pltpu.PrefetchScalarGridSpec(
            num_scalar_prefetch=0,
            grid=(grid_r, grid_c),
            in_specs=[
                pl.BlockSpec((block_r, block_c), lambda i, j: (i, j)),
                pl.BlockSpec((block_r, block_c), lambda i, j: (i, j)),
            ],
            out_specs=[
                pl.BlockSpec((1, _SUBLANE, _LANE), lambda i, j: (i, 0, 0)),
                pl.BlockSpec((1, _SUBLANE, _LANE), lambda i, j: (i, 0, 0)),
            ],
            scratch_shapes=[
                pltpu.VMEM((acc_rows, block_c), jnp.float32),
                pltpu.VMEM((acc_rows, block_c), jnp.int32),
            ],
        ),
        compiler_params=pltpu.CompilerParams(
            # TODO(synk): on v7x, verify both TensorCores pick up the row-block
            # axis; switch to pltpu.CORE_PARALLEL if xprof shows one TC idle.
            dimension_semantics=("parallel", "arbitrary"),
            vmem_limit_bytes=_VMEM_LIMIT_BYTES,
        ),
        cost_estimate=cost,
    )(pred2d, tgt2d)

    total_sum = jnp.sum(sums[:, 0, 0])
    total_cnt = jnp.sum(counts[:, 0, 0])
    # All-NaN target -> 0/0 = NaN, same as torch.mean of an empty selection.
    return total_sum / total_cnt


def _reference(prediction, target):
    valid = ~jnp.isnan(target)
    err = jnp.where(valid, jnp.abs(prediction - target), 0.0)
    return jnp.sum(err) / jnp.sum(valid.astype(jnp.float32))


if __name__ == "__main__":
    key = jax.random.PRNGKey(0)
    k_pred, k_tgt, k_nan = jax.random.split(key, 3)

    # NCHW-style input consistent with the module.
    B, C, H, W = 2, 4, 16, 16
    prediction = jax.random.normal(k_pred, (B, C, H, W), dtype=jnp.float32)
    target = jax.random.normal(k_tgt, (B, C, H, W), dtype=jnp.float32)
    nan_mask = jax.random.uniform(k_nan, (B, C, H, W)) < 0.2
    target = jnp.where(nan_mask, jnp.nan, target)

    loss = custom_mae_loss(prediction, target)
    jax.block_until_ready(loss)
    ref = _reference(prediction, target)
    assert jnp.allclose(loss, ref, rtol=1e-5, atol=1e-6), (loss, ref)

    # Fallback path: width not factorable into a lane-aligned slab, wider than
    # one column block -> multiple col blocks, col-tail masking, full-tile
    # accumulator (block_r not a multiple of 8).
    ka, kb, kc = jax.random.split(jax.random.PRNGKey(1), 3)
    p2 = jax.random.normal(ka, (4, 70000), dtype=jnp.float32)
    t2 = jax.random.normal(kb, (4, 70000), dtype=jnp.float32)
    t2 = jnp.where(jax.random.uniform(kc, (4, 70000)) < 0.3, jnp.nan, t2)
    loss2 = custom_mae_loss(p2, t2)
    jax.block_until_ready(loss2)
    assert jnp.allclose(loss2, _reference(p2, t2), rtol=1e-5, atol=1e-6)

    # Multi row-block path: several "parallel" row blocks, sublane-folded
    # (8, block_c) accumulator, row-tail masking on the last row block,
    # per-row-block partials combined in the wrapper.
    kd, ke, kf = jax.random.split(jax.random.PRNGKey(2), 3)
    p3 = jax.random.normal(kd, (2, 1_105_920), dtype=jnp.float32)
    t3 = jax.random.normal(ke, (2, 1_105_920), dtype=jnp.float32)
    t3 = jnp.where(jax.random.uniform(kf, (2, 1_105_920)) < 0.1, jnp.nan, t3)
    loss3 = custom_mae_loss(p3, t3)
    jax.block_until_ready(loss3)
    assert jnp.allclose(loss3, _reference(p3, t3), rtol=2e-5, atol=1e-6)

    print("KERNEL_OK")
</pallas_src>

<mosaic_0001>
module attributes {stable_mosaic.version = 11 : i64} {
  func.func @_mae_kernel(%arg0: i32, %arg1: i32, %arg2: memref<8x256xf32, #tpu.memory_space<vmem>>, %arg3: memref<8x256xf32, #tpu.memory_space<vmem>>, %arg4: memref<1x8x128xf32, #tpu.memory_space<vmem>>, %arg5: memref<1x8x128xf32, #tpu.memory_space<vmem>>, %arg6: memref<8x256xf32, #tpu.memory_space<vmem>>, %arg7: memref<8x256xi32, #tpu.memory_space<vmem>>) attributes {dimension_semantics = [#tpu.dimension_semantics<parallel>, #tpu.dimension_semantics<arbitrary>], iteration_bounds = array<i64: 1, 1>, scalar_prefetch = 0 : i64, scratch_operands = 2 : i64, tpu.core_type = #tpu.core_type<tc>, window_params = [{transform_indices = @transform_0, window_bounds = array<i64: 8, 256>}, {transform_indices = @transform_1, window_bounds = array<i64: 8, 256>}, {transform_indices = @transform_2, window_bounds = array<i64: 1, 8, 128>}, {transform_indices = @transform_3, window_bounds = array<i64: 1, 8, 128>}]} {
    %c0_i32 = arith.constant 0 : i32
    %0 = arith.cmpi eq, %arg1, %c0_i32 : i32
    %1 = arith.extui %0 : i1 to i32
    %c0_i32_0 = arith.constant 0 : i32
    %2 = arith.cmpi ne, %1, %c0_i32_0 : i32
    scf.if %2 {
      %cst_17 = arith.constant 0.000000e+00 : f32
      %25 = vector.broadcast %cst_17 : f32 to vector<8x256xf32>
      %c0_18 = arith.constant 0 : index
      %c0_19 = arith.constant 0 : index
      %26 = vector.load %arg6[%c0_18, %c0_19] : memref<8x256xf32, #tpu.memory_space<vmem>>, vector<8x256xf32>
      tpu.vector_store %arg6[%c0_18, %c0_19], %25 {strides = array<i32>} : memref<8x256xf32, #tpu.memory_space<vmem>>, vector<8x256xf32>,
      %c0_i32_20 = arith.constant 0 : i32
      %27 = vector.broadcast %c0_i32_20 : i32 to vector<8x256xi32>
      %c0_21 = arith.constant 0 : index
      %c0_22 = arith.constant 0 : index
      %28 = vector.load %arg7[%c0_21, %c0_22] : memref<8x256xi32, #tpu.memory_space<vmem>>, vector<8x256xi32>
      tpu.vector_store %arg7[%c0_21, %c0_22], %27 {strides = array<i32>} : memref<8x256xi32, #tpu.memory_space<vmem>>, vector<8x256xi32>,
    } else {
    }
    %c0 = arith.constant 0 : index
    %c0_1 = arith.constant 0 : index
    %3 = vector.load %arg2[%c0, %c0_1] : memref<8x256xf32, #tpu.memory_space<vmem>>, vector<8x256xf32>
    %c0_2 = arith.constant 0 : index
    %c0_3 = arith.constant 0 : index
    %4 = vector.load %arg3[%c0_2, %c0_3] : memref<8x256xf32, #tpu.memory_space<vmem>>, vector<8x256xf32>
    %5 = arith.cmpf one, %4, %4 : vector<8x256xf32>
    %cst = arith.constant dense<true> : vector<8x256xi1>
    %6 = arith.xori %5, %cst : vector<8x256xi1>
    %7 = arith.subf %3, %4 : vector<8x256xf32>
    %8 = math.absf %7 : vector<8x256xf32>
    %cst_4 = arith.constant 0.000000e+00 : f32
    %9 = vector.broadcast %cst_4 : f32 to vector<8x256xf32>
    %10 = arith.select %6, %8, %9 : vector<8x256xi1>, vector<8x256xf32>
    %11 = arith.extui %6 : vector<8x256xi1> to vector<8x256xi32>
    %12 = vector.shape_cast %10 : vector<8x256xf32> to vector<1x8x256xf32>
    %cst_5 = arith.constant dense<0.000000e+00> : vector<8x256xf32>
    %13 = vector.multi_reduction <add>, %12, %cst_5 [0] : vector<1x8x256xf32> to vector<8x256xf32>
    %14 = vector.shape_cast %11 : vector<8x256xi32> to vector<1x8x256xi32>
    %cst_6 = arith.constant dense<0> : vector<8x256xi32>
    %15 = vector.multi_reduction <add>, %14, %cst_6 [0] : vector<1x8x256xi32> to vector<8x256xi32>
    %c0_7 = arith.constant 0 : index
    %c0_8 = arith.constant 0 : index
    %16 = vector.load %arg6[%c0_7, %c0_8] : memref<8x256xf32, #tpu.memory_space<vmem>>, vector<8x256xf32>
    %17 = arith.addf %16, %13 : vector<8x256xf32>
    %c0_9 = arith.constant 0 : index
    %c0_10 = arith.constant 0 : index
    %18 = vector.load %arg6[%c0_9, %c0_10] : memref<8x256xf32, #tpu.memory_space<vmem>>, vector<8x256xf32>
    tpu.vector_store %arg6[%c0_9, %c0_10], %17 {strides = array<i32>} : memref<8x256xf32, #tpu.memory_space<vmem>>, vector<8x256xf32>,
    %c0_11 = arith.constant 0 : index
    %c0_12 = arith.constant 0 : index
    %19 = vector.load %arg7[%c0_11, %c0_12] : memref<8x256xi32, #tpu.memory_space<vmem>>, vector<8x256xi32>
    %20 = arith.addi %19, %15 : vector<8x256xi32>
    %c0_13 = arith.constant 0 : index
    %c0_14 = arith.constant 0 : index
    %21 = vector.load %arg7[%c0_13, %c0_14] : memref<8x256xi32, #tpu.memory_space<vmem>>, vector<8x256xi32>
    tpu.vector_store %arg7[%c0_13, %c0_14], %20 {strides = array<i32>} : memref<8x256xi32, #tpu.memory_space<vmem>>, vector<8x256xi32>,
    %c0_i32_15 = arith.constant 0 : i32
    %22 = arith.cmpi eq, %arg1, %c0_i32_15 : i32
    %23 = arith.extui %22 : i1 to i32
    %c0_i32_16 = arith.constant 0 : i32
    %24 = arith.cmpi ne, %23, %c0_i32_16 : i32
    scf.if %24 {
      %c0_17 = arith.constant 0 : index
      %c0_18 = arith.constant 0 : index
      %25 = vector.load %arg6[%c0_17, %c0_18] : memref<8x256xf32, #tpu.memory_space<vmem>>, vector<8x256xf32>
      %26 = vector.shape_cast %25 : vector<8x256xf32> to vector<1x8x256xf32>
      %cst_19 = arith.constant dense<0.000000e+00> : vector<1xf32>
      %27 = vector.multi_reduction <add>, %26, %cst_19 [1, 2] : vector<1x8x256xf32> to vector<1xf32>
      %28 = vector.shape_cast %27 : vector<1xf32> to vector<1x1x1xf32>
      %29 = vector.extract %28[0, 0, 0] : f32 from vector<1x1x1xf32>
      %c0_20 = arith.constant 0 : index
      %c0_21 = arith.constant 0 : index
      %30 = vector.load %arg7[%c0_20, %c0_21] : memref<8x256xi32, #tpu.memory_space<vmem>>, vector<8x256xi32>
      %31 = arith.sitofp %30 : vector<8x256xi32> to vector<8x256xf32>
      %32 = vector.shape_cast %31 : vector<8x256xf32> to vector<1x8x256xf32>
      %cst_22 = arith.constant dense<0.000000e+00> : vector<1xf32>
      %33 = vector.multi_reduction <add>, %32, %cst_22 [1, 2] : vector<1x8x256xf32> to vector<1xf32>
      %34 = vector.shape_cast %33 : vector<1xf32> to vector<1x1x1xf32>
      %35 = vector.extract %34[0, 0, 0] : f32 from vector<1x1x1xf32>
      %36 = vector.broadcast %29 : f32 to vector<1x8x128xf32>
      %c0_23 = arith.constant 0 : index
      %c0_24 = arith.constant 0 : index
      %c0_25 = arith.constant 0 : index
      %37 = vector.load %arg4[%c0_23, %c0_24, %c0_25] : memref<1x8x128xf32, #tpu.memory_space<vmem>>, vector<1x8x128xf32>
      tpu.vector_store %arg4[%c0_23, %c0_24, %c0_25], %36 {strides = array<i32>} : memref<1x8x128xf32, #tpu.memory_space<vmem>>, vector<1x8x128xf32>,
      %38 = vector.broadcast %35 : f32 to vector<1x8x128xf32>
      %c0_26 = arith.constant 0 : index
      %c0_27 = arith.constant 0 : index
      %c0_28 = arith.constant 0 : index
      %39 = vector.load %arg5[%c0_26, %c0_27, %c0_28] : memref<1x8x128xf32, #tpu.memory_space<vmem>>, vector<1x8x128xf32>
      tpu.vector_store %arg5[%c0_26, %c0_27, %c0_28], %38 {strides = array<i32>} : memref<1x8x128xf32, #tpu.memory_space<vmem>>, vector<1x8x128xf32>,
    } else {
    }
    return
  }
  func.func @transform_0(%arg0: i32, %arg1: i32) -> (i32, i32) {
    %c0_i32 = arith.constant 0 : i32
    return %arg0, %arg1 : i32, i32
  }
  func.func @transform_1(%arg0: i32, %arg1: i32) -> (i32, i32) {
    %c0_i32 = arith.constant 0 : i32
    return %arg0, %arg1 : i32, i32
  }
  func.func @transform_2(%arg0: i32, %arg1: i32) -> (i32, i32, i32) {
    %c0_i32 = arith.constant 0 : i32
    %c0_i32_0 = arith.constant 0 : i32
    %c0_i32_1 = arith.constant 0 : i32
    return %arg0, %c0_i32, %c0_i32_0 : i32, i32, i32
  }
  func.func @transform_3(%arg0: i32, %arg1: i32) -> (i32, i32, i32) {
    %c0_i32 = arith.constant 0 : i32
    %c0_i32_0 = arith.constant 0 : i32
    %c0_i32_1 = arith.constant 0 : i32
    return %arg0, %c0_i32, %c0_i32_0 : i32, i32, i32
  }
}

</mosaic_0001>

<llo_original>
// kernel: tpu_custom_call.1
$region0: #{tpu_custom_call.1}
  #allocation0 [shape = 'u32[]', space=smem, size = 0x4, offset = 0x4, fixed_abs, tag = 'smem constant byte address 0x4 - core index']
  #allocation1 [shape = 'u32[144,128]{1,0:T(1,128)}', space=vmem, size = 0x12000, scoped, tag = 'internal scratch']
  #allocation2 [shape = 'f32[8,256]{1,0:T(8,128)}', space=vmem, size = 0x2000, scoped, tag = 'scratch operand']
  #allocation3 [shape = 's32[8,256]{1,0:T(8,128)}', space=vmem, size = 0x2000, scoped, tag = 'scratch operand']
  %s0 = inlined_call_operand.hbm [shape: f32[8,256], index: 0, kind: input, shape index: {}]
  %s1 = inlined_call_operand.hbm [shape: f32[8,256], index: 1, kind: input, shape index: {}]
  %s2 = inlined_call_operand.hbm [shape: f32[1,8,128], index: 2, kind: output, shape index: {0}]
  %s3 = inlined_call_operand.hbm [shape: f32[1,8,128], index: 3, kind: output, shape index: {1}]
  %4 = xla_tuple %s2, %s3
  %s5 = sld [smem:[#allocation0]]
  $region42: #{tpu_custom_call.1} parent=0
    _
  %s7 = ssub.s32 1, %s5
  %s8 = scalar_select 0, %s7, %s5
  $region1: #{tpu_custom_call.1} parent=0
    #allocation4 [shape = 'u8[8192]{0}', space=vmem, size = 0x2000, scoped, tag = 'input window, operand 0, single buffered']
    #allocation5 [shape = 's32[1]{0}', space=sflag, size = 0x4, scoped, tag = 'scoped memory for tpu_custom_call.1']
    #allocation6 [shape = 's32[1]{0}', space=sflag, size = 0x4, scoped, tag = 'scoped memory for tpu_custom_call.1']
    #allocation7 [shape = 'u8[8192]{0}', space=vmem, size = 0x2000, scoped, tag = 'input window, operand 1, single buffered']
    #allocation8 [shape = 's32[1]{0}', space=sflag, size = 0x4, scoped, tag = 'scoped memory for tpu_custom_call.1']
    #allocation9 [shape = 'u8[4096]{0}', space=vmem, size = 0x1000, scoped, tag = 'output window, operand 0, single buffered']
    #allocation10 [shape = 'u8[4096]{0}', space=vmem, size = 0x1000, scoped, tag = 'output window, operand 1, single buffered']
    #allocation11 [shape = 's32[1]{0}', space=sflag, size = 0x4, scoped, tag = 'scoped memory for tpu_custom_call.1']
    %9 = vsyncpa [#allocation5], 0
    %10 = vsyncpa [#allocation8], 0
    %11 = vsyncpa [#allocation6], 0
    %12 = vsyncpa [#allocation11], 0
    // Predicated region
    $region2: #{tpu_custom_call.1} parent=1 // pred_check
      _
    $region3: #{tpu_custom_call.1} parent=1 // pred_check_branch
      %14 = sbr.rel (0) target = $region5
    $region4: #{tpu_custom_call.1} parent=1 // pred_region
      %s16 = ssub.s32 256, 256
      %17 = vsyncadd [#allocation5], %s16
      %s19 = sshll.u32 [#allocation4], 4
      %s20 = int_to_ptr.vmem [resolvable:$true] %s19
      %22 = dma.hbm_to_vmem [thread:$0]  %s0, 256, %s20, [#allocation5]
    $region5: #{tpu_custom_call.1} parent=1 // pred_fallthru
      _
    // Predicated region
    $region6: #{tpu_custom_call.1} parent=1 // pred_check
      _
    $region7: #{tpu_custom_call.1} parent=1 // pred_check_branch
      %24 = sbr.rel (0) target = $region9
    $region8: #{tpu_custom_call.1} parent=1 // pred_region
      %s26 = ssub.s32 256, 256
      %27 = vsyncadd [#allocation8], %s26
      %s29 = sshll.u32 [#allocation7], 4
      %s30 = int_to_ptr.vmem [resolvable:$true] %s29
      %32 = dma.hbm_to_vmem [thread:$0]  %s1, 256, %s30, [#allocation8]
    $region9: #{tpu_custom_call.1} parent=1 // pred_fallthru
      _
    // Predicated region
    $region10: #{tpu_custom_call.1} parent=1 // pred_check
      _
    $region11: #{tpu_custom_call.1} parent=1 // pred_check_branch
      %34 = sbr.rel (0) target = $region13
    $region12: #{tpu_custom_call.1} parent=1 // pred_region
      %35 = dma.done [#allocation5], 256
    $region13: #{tpu_custom_call.1} parent=1 // pred_fallthru
      _
    // Predicated region
    $region14: #{tpu_custom_call.1} parent=1 // pred_check
      _
    $region15: #{tpu_custom_call.1} parent=1 // pred_check_branch
      %37 = sbr.rel (0) target = $region17
    $region16: #{tpu_custom_call.1} parent=1 // pred_region
      %38 = dma.done [#allocation8], 256
    $region17: #{tpu_custom_call.1} parent=1 // pred_fallthru
      _
    %p39 = scmp.eq.s32.totalorder 0, 0
    // Predicated region
    $region18: #{tpu_custom_call.1} parent=1 // pred_check
      %p40 = pneg %p39
    $region19: #{tpu_custom_call.1} parent=1 // pred_check_branch
      %42 = sbr.rel (%p40) target = $region21
    $region20: #{tpu_custom_call.1} parent=1 // pred_region
      %43 = vst [vmem:[#allocation2] sm:$0xff] 0.0
      %44 = vst [vmem:[#allocation2 + $0x8] sm:$0xff] 0.0
      %45 = vst [vmem:[#allocation3] sm:$0xff] 0
      %46 = vst [vmem:[#allocation3 + $0x8] sm:$0xff] 0
    $region21: #{tpu_custom_call.1} parent=1 // pred_fallthru
      _
    %v47 = vld [vmem:[#allocation4] sm:$0xff]
    %v48 = vld [vmem:[#allocation4 + $0x8] sm:$0xff]
    %v49 = vld [vmem:[#allocation7] sm:$0xff]
    %v50 = vld [vmem:[#allocation7 + $0x8] sm:$0xff]
    %vm51 = vcmp.ne.f32.partialorder %v49, %v49
    %vm52 = vcmp.ne.f32.partialorder %v50, %v50
    %vm53 = vmxor %vm51, 1
    %vm54 = vmxor %vm52, 1
    %v55 = vsub.f32 %v47, %v49
    %v56 = vsub.f32 %v48, %v50
    %v57 = vand.u32 2147483647, %v55
    %v58 = vand.u32 2147483647, %v56
    %v59 = vsel %vm53, %v57, 0.0
    %v60 = vsel %vm54, %v58, 0.0
    %v61 = vsel %vm53, 1, 0
    %v62 = vsel %vm54, 1, 0
    %v63 = vadd.f32 %v59, 0.0
    %v64 = vadd.f32 %v60, 0.0
    %v65 = vld [vmem:[#allocation2] sm:$0xff]
    %v66 = vld [vmem:[#allocation2 + $0x8] sm:$0xff]
    %v67 = vadd.f32 %v65, %v63
    %v68 = vadd.f32 %v66, %v64
    %69 = vst [vmem:[#allocation2] sm:$0xff] %v67
    %70 = vst [vmem:[#allocation2 + $0x8] sm:$0xff] %v68
    %v71 = vld [vmem:[#allocation3] sm:$0xff]
    %v72 = vld [vmem:[#allocation3 + $0x8] sm:$0xff]
    %v73 = vadd.s32 %v71, %v61
    %v74 = vadd.s32 %v72, %v62
    %75 = vst [vmem:[#allocation3] sm:$0xff] %v73
    %76 = vst [vmem:[#allocation3 + $0x8] sm:$0xff] %v74
    // Predicated region
    $region22: #{tpu_custom_call.1} parent=1 // pred_check
      %p77 = pneg %p39
    $region23: #{tpu_custom_call.1} parent=1 // pred_check_branch
      %79 = sbr.rel (%p77) target = $region25
    $region24: #{tpu_custom_call.1} parent=1 // pred_region
      %v80 = vld [vmem:[#allocation2] sm:$0xff]
      %v81 = vld [vmem:[#allocation2 + $0x8] sm:$0xff]
      %v82 = vadd.f32 %v80, %v81
      %83 = vadd.xlane.f32.xlu0 %v82
      %v84 = vpop.xlane.xlu0 %83
      %v85 = vrot.slane %v84, 4
      %v86 = vadd.f32 %v84, %v85
      %v87 = vrot.slane %v86, 2
      %v88 = vadd.f32 %v86, %v87
      %v89 = vrot.slane %v88, 1
      %v90 = vadd.f32 %v88, %v89
      %s91 = vtos %v90
      %v92 = vld [vmem:[#allocation3] sm:$0xff]
      %v93 = vld [vmem:[#allocation3 + $0x8] sm:$0xff]
      %v94 = vcvt.s32.f32 %v92
      %v95 = vcvt.s32.f32 %v93
      %v96 = vadd.f32 %v94, %v95
      %97 = vadd.xlane.f32.xlu0 %v96
      %v98 = vpop.xlane.xlu0 %97
      %v99 = vrot.slane %v98, 4
      %v100 = vadd.f32 %v98, %v99
      %v101 = vrot.slane %v100, 2
      %v102 = vadd.f32 %v100, %v101
      %v103 = vrot.slane %v102, 1
      %v104 = vadd.f32 %v102, %v103
      %s105 = vtos %v104
      %v106 = vstv %s91
      %107 = vst [vmem:[#allocation9] sm:$0xff] %v106
      %v108 = vstv %s105
      %109 = vst [vmem:[#allocation10] sm:$0xff] %v108
    $region25: #{tpu_custom_call.1} parent=1 // pred_fallthru
      _
    // Predicated region
    $region26: #{tpu_custom_call.1} parent=1 // pred_check
      _
    $region27: #{tpu_custom_call.1} parent=1 // pred_check_branch
      %111 = sbr.rel (0) target = $region29
    $region28: #{tpu_custom_call.1} parent=1 // pred_region
      %s113 = ssub.s32 128, 128
      %114 = vsyncadd [#allocation6], %s113
      %s116 = sshll.u32 [#allocation9], 4
      %s117 = int_to_ptr.vmem [resolvable:$true] %s116
      %119 = dma.vmem_to_hbm [thread:$0]  %s117, 128, %s2, [#allocation6]
    $region29: #{tpu_custom_call.1} parent=1 // pred_fallthru
      _
    // Predicated region
    $region30: #{tpu_custom_call.1} parent=1 // pred_check
      _
    $region31: #{tpu_custom_call.1} parent=1 // pred_check_branch
      %121 = sbr.rel (0) target = $region33
    $region32: #{tpu_custom_call.1} parent=1 // pred_region
      %s123 = ssub.s32 128, 128
      %124 = vsyncadd [#allocation11], %s123
      %s126 = sshll.u32 [#allocation10], 4
      %s127 = int_to_ptr.vmem [resolvable:$true] %s126
      %129 = dma.vmem_to_hbm [thread:$0]  %s127, 128, %s3, [#allocation11]
    $region33: #{tpu_custom_call.1} parent=1 // pred_fallthru
      _
    // Predicated region
    $region34: #{tpu_custom_call.1} parent=1 // pred_check
      _
    $region35: #{tpu_custom_call.1} parent=1 // pred_check_branch
      %131 = sbr.rel (0) target = $region37
    $region36: #{tpu_custom_call.1} parent=1 // pred_region
      %132 = dma.done [#allocation6], 128
    $region37: #{tpu_custom_call.1} parent=1 // pred_fallthru
      _
    // Predicated region
    $region38: #{tpu_custom_call.1} parent=1 // pred_check
      _
    $region39: #{tpu_custom_call.1} parent=1 // pred_check_branch
      %134 = sbr.rel (0) target = $region41
    $region40: #{tpu_custom_call.1} parent=1 // pred_region
      %135 = dma.done [#allocation11], 128
    $region41: #{tpu_custom_call.1} parent=1 // pred_fallthru
      _
    %136 = vsyncpa [#allocation5], 1
    %137 = vsyncpa [#allocation8], 1
    %138 = vsyncpa [#allocation6], 1
    %139 = vsyncpa [#allocation11], 1

</llo_original>
